<compile_context>
chip_gen: v7x
topology: tpu7x:2x2x1
jax: 0.10.0
libtpu: 0.0.40
codegen_flags: <defaults>
</compile_context>

<pallas_src>
import math

import jax
import jax.numpy as jnp
from jax.experimental import pallas as pl
from jax.experimental.pallas import tpu as pltpu


def _round_up(v, m):
    return (v + m - 1) // m * m


# ----------------------------------------------------------------------------
# Core tiled conv kernel on a flat spatial layout.
# ----------------------------------------------------------------------------
def _conv_flat(xflat, wt, bias, *, Wp, Hpad, tap_offsets, TH=16):
    """Tiled conv + bias + ReLU on a flattened padded layout.

    xflat : (N, (Hpad+4)*Wp, Cin) bf16  flat padded activations (row-major (row, Wp))
    wt    : (T, Cin, Cout)        bf16  one weight slice per tap
    bias  : (1, Cout)             f32
    tap_offsets : static flat-row offset of each tap (dh*Wp + dw)

    Returns (N, Hpad*Wp, Cout) bf16.
    """
    N, Lf, Cin = xflat.shape
    T, _, Cout = wt.shape
    assert TH % 4 == 0 and Wp % 8 == 0 and Hpad % TH == 0
    assert Lf == (Hpad + 4) * Wp

    THW = TH * Wp                    # flat output rows per tile (multiple of 128)
    BH = 4 * Wp                      # halo rows fetched from the next row tile
    nH = Hpad // TH
    TN = Cout if Cout < 128 else (256 if Cout % 256 == 0 else 128)
    assert Cout % TN == 0
    nC = Cout // TN
    Mout = Hpad * Wp
    halo = max(tap_offsets) > 0
    assert max(tap_offsets) <= BH

    cparams = pltpu.CompilerParams(
        dimension_semantics=("parallel", "parallel", "parallel"),
        vmem_limit_bytes=48 * 1024 * 1024,
    )
    out_spec = pl.BlockSpec((1, THW, TN), lambda n, ci, hi: (n, hi, ci))
    out_shape = jax.ShapeDtypeStruct((N, Mout, Cout), xflat.dtype)

    if halo:
        def kernel(xa_ref, xb_ref, w_ref, b_ref, o_ref, win_ref, acc_ref):
            # Stage row tile + halo contiguously once, then feed the MXU with
            # T shifted views (static offsets), accumulating in f32 VMEM.
            win_ref[pl.ds(0, THW), :] = xa_ref[0]
            win_ref[pl.ds(THW, BH), :] = xb_ref[0]
            for t, off in enumerate(tap_offsets):
                contrib = jnp.dot(win_ref[pl.ds(off, THW), :], w_ref[t],
                                  preferred_element_type=jnp.float32)
                if t == 0:
                    acc_ref[...] = contrib
                else:
                    acc_ref[...] += contrib
            o_ref[0] = jnp.maximum(acc_ref[...] + b_ref[...],
                                   0.0).astype(o_ref.dtype)

        in_specs = [
            pl.BlockSpec((1, THW, Cin), lambda n, ci, hi: (n, hi, 0)),
            pl.BlockSpec((1, BH, Cin),
                         lambda n, ci, hi: (n, (hi + 1) * (TH // 4), 0)),
            pl.BlockSpec((T, Cin, TN), lambda n, ci, hi: (0, 0, ci)),
            pl.BlockSpec((1, TN), lambda n, ci, hi: (0, ci)),
        ]
        scratch = [
            pltpu.VMEM((THW + BH, Cin), xflat.dtype),
            pltpu.VMEM((THW, TN), jnp.float32),
        ]
        args = (xflat, xflat, wt, bias)
    else:
        def kernel(xa_ref, w_ref, b_ref, o_ref, acc_ref):
            acc_ref[...] = jnp.dot(xa_ref[0], w_ref[0],
                                   preferred_element_type=jnp.float32)
            o_ref[0] = jnp.maximum(acc_ref[...] + b_ref[...],
                                   0.0).astype(o_ref.dtype)

        in_specs = [
            pl.BlockSpec((1, THW, Cin), lambda n, ci, hi: (n, hi, 0)),
            pl.BlockSpec((T, Cin, TN), lambda n, ci, hi: (0, 0, ci)),
            pl.BlockSpec((1, TN), lambda n, ci, hi: (0, ci)),
        ]
        scratch = [pltpu.VMEM((THW, TN), jnp.float32)]
        args = (xflat, wt, bias)

    return pl.pallas_call(
        kernel,
        out_shape=out_shape,
        grid=(N, nC, nH),
        in_specs=in_specs,
        out_specs=out_spec,
        scratch_shapes=scratch,
        compiler_params=cparams,
    )(*args)


# ----------------------------------------------------------------------------
# Conv 3x3 (padding=1, stride=1) + bias + ReLU.
# ----------------------------------------------------------------------------
def conv3x3_relu(x, w, b, TH=16):
    """x: (N, H, W, Cin); w: (3, 3, Cin, Cout); b: (Cout,) -> (N, H, W, Cout) bf16."""
    x = x.astype(jnp.bfloat16)
    N, H, W, Cin = x.shape
    Cout = w.shape[-1]
    Wp = _round_up(W + 2, 8)           # lane-aligned padded width
    Hpad = _round_up(H, TH)

    # Glue: zero-pad (1 top/left border + alignment padding) and flatten.
    xp = jnp.pad(x, ((0, 0), (1, Hpad + 3 - H), (1, Wp - W - 1), (0, 0)))
    xf = xp.reshape(N, (Hpad + 4) * Wp, Cin)

    wt = w.reshape(9, Cin, Cout).astype(jnp.bfloat16)
    bias = b.reshape(1, Cout).astype(jnp.float32)
    offs = [dh * Wp + dw for dh in range(3) for dw in range(3)]

    out = _conv_flat(xf, wt, bias, Wp=Wp, Hpad=Hpad, tap_offsets=offs, TH=TH)
    # Glue: drop alignment rows/columns (free reshape + slice).
    return out.reshape(N, Hpad, Wp, Cout)[:, :H, :W, :]


def conv1_im2col_relu(x, w, b, TH=16):
    """First conv (Cin=3): full im2col -> single (M, 27) @ (27, 64) matmul."""
    N, H, W, Cin = x.shape
    Cout = w.shape[-1]
    xp = jnp.pad(x, ((0, 0), (1, 1), (1, 1), (0, 0)))
    cols = [xp[:, dh:dh + H, dw:dw + W, :] for dh in range(3) for dw in range(3)]
    xcol = jnp.concatenate(cols, axis=-1).astype(jnp.bfloat16)   # (N, H, W, 9*Cin)

    Wp = _round_up(W, 8)
    Hpad = _round_up(H, TH)
    xcp = jnp.pad(xcol, ((0, 0), (0, Hpad + 4 - H), (0, Wp - W), (0, 0)))
    xf = xcp.reshape(N, (Hpad + 4) * Wp, 9 * Cin)

    wt = w.reshape(9 * Cin, Cout)[None].astype(jnp.bfloat16)     # (1, 27, Cout)
    bias = b.reshape(1, Cout).astype(jnp.float32)

    out = _conv_flat(xf, wt, bias, Wp=Wp, Hpad=Hpad, tap_offsets=[0], TH=TH)
    return out.reshape(N, Hpad, Wp, Cout)[:, :H, :W, :]


# ----------------------------------------------------------------------------
# Fused max-pool 2x2 stride 2 (single kernel, no transposes).
# ----------------------------------------------------------------------------
def maxpool2x2(x):
    """(N, H, W, C) -> (N, H//2, W//2, C); floor-truncates odd dims like PyTorch."""
    N, H, W, C = x.shape
    Ho, Wo = H // 2, W // 2
    x = x[:, :2 * Ho, :2 * Wo, :]
    # Free reshape: element (n, ho, i, wo, j*C + c) == x[n, 2*ho+i, 2*wo+j, c].
    x5 = x.reshape(N, Ho, 2, Wo, 2 * C)
    Th = math.gcd(Ho, 8)               # several output rows per grid step

    def kernel(x_ref, o_ref):
        a = jnp.maximum(x_ref[0, :, 0], x_ref[0, :, 1])   # (Th, Wo, 2C) row-pair max
        o_ref[0] = jnp.maximum(a[..., :C], a[..., C:])    # column-pair max

    return pl.pallas_call(
        kernel,
        out_shape=jax.ShapeDtypeStruct((N, Ho, Wo, C), x.dtype),
        grid=(N, Ho // Th),
        in_specs=[pl.BlockSpec((1, Th, 2, Wo, 2 * C),
                               lambda n, hi: (n, hi, 0, 0, 0))],
        out_specs=pl.BlockSpec((1, Th, Wo, C), lambda n, hi: (n, hi, 0, 0)),
        compiler_params=pltpu.CompilerParams(
            dimension_semantics=("parallel", "parallel")),
    )(x5)


# ----------------------------------------------------------------------------
# Parameters (deterministic synthetic init; shapes match torchvision vgg19.features).
# ----------------------------------------------------------------------------
_CONV_CFG = [
    (3, 64), (64, 64),                                   # stage 1
    (64, 128), (128, 128),                               # stage 2
    (128, 256), (256, 256), (256, 256), (256, 256),      # stage 3
    (256, 512), (512, 512), (512, 512), (512, 512),      # stage 4
    (512, 512), (512, 512), (512, 512), (512, 512),      # stage 5
]
_STAGE_NUM_CONVS = [2, 2, 4, 4, 4]


def init_vgg_params(key):
    # TODO(synk): pretrained VGG19_Weights.DEFAULT cannot be loaded here;
    # parameters are synthesized deterministically with He-style init.
    params = []
    for cin, cout in _CONV_CFG:
        key, kw, kb = jax.random.split(key, 3)
        std = (2.0 / (9.0 * cin)) ** 0.5
        w = jax.random.normal(kw, (3, 3, cin, cout), jnp.float32) * std
        b = jax.random.normal(kb, (cout,), jnp.float32) * 0.01
        params.append((w, b))
    return params


# ----------------------------------------------------------------------------
# Forward pass matching VGG.get_features / VGG.forward semantics.
# ----------------------------------------------------------------------------
def vgg_features(x_nchw, params, vgg_weights=(0.5, 0.5, 1.0, 1.0, 1.0)):
    """x_nchw: (N, 3, H, W) f32 -> list of 5 NCHW f32 feature maps."""
    mean = jnp.array([0.485, 0.456, 0.406], jnp.float32).reshape(1, 3, 1, 1)
    std = jnp.array([0.229, 0.224, 0.225], jnp.float32).reshape(1, 3, 1, 1)
    h = (x_nchw - mean) / std                   # glue: 3-channel normalize
    h = jnp.transpose(h, (0, 2, 3, 1))          # NCHW -> NHWC (kernel layout)

    feats = []
    layer = 0
    for stage_idx, n_convs in enumerate(_STAGE_NUM_CONVS):
        if stage_idx > 0:
            h = maxpool2x2(h)                   # stages 2..5 start with MaxPool2d(2,2)
        for _ in range(n_convs):
            w, b = params[layer]
            if layer == 0:
                h = conv1_im2col_relu(h, w, b)  # Cin=3: im2col + single matmul
            else:
                h = conv3x3_relu(h, w, b)       # fused conv + bias + ReLU
            layer += 1
        # Returned feature is scaled; the running activation `h` is NOT.
        feats.append(jnp.transpose(h, (0, 3, 1, 2)).astype(jnp.float32)
                     * vgg_weights[stage_idx])
    return feats


if __name__ == "__main__":
    key = jax.random.PRNGKey(0)
    key, kx, kp = jax.random.split(key, 3)

    # Small deterministic input: batch=2, RGB, 16x16 (NCHW like PyTorch).
    x = jax.random.uniform(kx, (2, 3, 16, 16), jnp.float32)
    params = init_vgg_params(kp)

    feats = vgg_features(x, params)
    feats = [jax.block_until_ready(f) for f in feats]

    expected_shapes = [(2, 64, 16, 16), (2, 128, 8, 8), (2, 256, 4, 4),
                       (2, 512, 2, 2), (2, 512, 1, 1)]
    assert [tuple(f.shape) for f in feats] == expected_shapes
    assert all(bool(jnp.all(jnp.isfinite(f))) for f in feats)

    # Numerical sanity check of stage 1 (conv1_1 + conv1_2 + scaling) against
    # an XLA reference (bf16 MXU inputs vs f32 reference -> loose tolerance).
    mean = jnp.array([0.485, 0.456, 0.406], jnp.float32).reshape(1, 3, 1, 1)
    std = jnp.array([0.229, 0.224, 0.225], jnp.float32).reshape(1, 3, 1, 1)
    h_ref = jnp.transpose((x - mean) / std, (0, 2, 3, 1))
    for (w, b) in params[:2]:
        h_ref = jax.lax.conv_general_dilated(
            h_ref, w, window_strides=(1, 1), padding="SAME",
            dimension_numbers=("NHWC", "HWIO", "NHWC"))
        h_ref = jnp.maximum(h_ref + b, 0.0)
    ref1 = jnp.transpose(h_ref, (0, 3, 1, 2)) * 0.5
    err = float(jnp.max(jnp.abs(feats[0] - ref1)))
    scale = float(jnp.max(jnp.abs(ref1))) + 1.0
    assert err <= 0.05 * scale, f"stage-1 mismatch: err={err}, scale={scale}"

    print("KERNEL_OK")
</pallas_src>

<mosaic_0001>
module attributes {stable_mosaic.version = 11 : i64} {
  func.func @kernel(%arg0: i32, %arg1: i32, %arg2: i32, %arg3: memref<1x256x27xbf16, #tpu.memory_space<vmem>>, %arg4: memref<1x27x64xbf16, #tpu.memory_space<vmem>>, %arg5: memref<1x64xf32, #tpu.memory_space<vmem>>, %arg6: memref<1x256x64xbf16, #tpu.memory_space<vmem>>, %arg7: memref<256x64xf32, #tpu.memory_space<vmem>>) attributes {dimension_semantics = [#tpu.dimension_semantics<parallel>, #tpu.dimension_semantics<parallel>, #tpu.dimension_semantics<parallel>], iteration_bounds = array<i64: 2, 1, 1>, scalar_prefetch = 0 : i64, scratch_operands = 1 : i64, tpu.core_type = #tpu.core_type<tc>, window_params = [{transform_indices = @transform_0, window_bounds = array<i64: 1, 256, 27>}, {transform_indices = @transform_1, window_bounds = array<i64: 1, 27, 64>}, {transform_indices = @transform_2, window_bounds = array<i64: 1, 64>}, {transform_indices = @transform_3, window_bounds = array<i64: 1, 256, 64>}]} {
    %c0 = arith.constant 0 : index
    %c0_0 = arith.constant 0 : index
    %c0_1 = arith.constant 0 : index
    %0 = vector.load %arg3[%c0, %c0_0, %c0_1] : memref<1x256x27xbf16, #tpu.memory_space<vmem>>, vector<1x256x27xbf16>
    %1 = vector.shape_cast %0 : vector<1x256x27xbf16> to vector<256x27xbf16>
    %c0_2 = arith.constant 0 : index
    %c0_3 = arith.constant 0 : index
    %c0_4 = arith.constant 0 : index
    %2 = vector.load %arg4[%c0_2, %c0_3, %c0_4] : memref<1x27x64xbf16, #tpu.memory_space<vmem>>, vector<1x27x64xbf16>
    %3 = vector.shape_cast %2 : vector<1x27x64xbf16> to vector<27x64xbf16>
    %cst = arith.constant dense<0.000000e+00> : vector<256x64xf32>
    %4 = tpu.matmul %1, %3, %cst {dimension_numbers = #tpu.dot_dimension_numbers<[1], [0], [0], [1], [0, 0, 1, 1], [], []>} : vector<256x27xbf16>, vector<27x64xbf16>, vector<256x64xf32> -> vector<256x64xf32>
    %c0_5 = arith.constant 0 : index
    %c0_6 = arith.constant 0 : index
    %5 = vector.load %arg7[%c0_5, %c0_6] : memref<256x64xf32, #tpu.memory_space<vmem>>, vector<256x64xf32>
    tpu.vector_store %arg7[%c0_5, %c0_6], %4 {strides = array<i32>} : memref<256x64xf32, #tpu.memory_space<vmem>>, vector<256x64xf32>,
    %c0_7 = arith.constant 0 : index
    %c0_8 = arith.constant 0 : index
    %6 = vector.load %arg7[%c0_7, %c0_8] : memref<256x64xf32, #tpu.memory_space<vmem>>, vector<256x64xf32>
    %c0_9 = arith.constant 0 : index
    %c0_10 = arith.constant 0 : index
    %7 = vector.load %arg5[%c0_9, %c0_10] : memref<1x64xf32, #tpu.memory_space<vmem>>, vector<1x64xf32>
    %8 = vector.broadcast %7 : vector<1x64xf32> to vector<256x64xf32>
    %9 = arith.addf %6, %8 : vector<256x64xf32>
    %cst_11 = arith.constant 0.000000e+00 : f32
    %10 = vector.broadcast %cst_11 : f32 to vector<256x64xf32>
    %11 = arith.maximumf %9, %10 : vector<256x64xf32>
    %12 = arith.truncf %11 : vector<256x64xf32> to vector<256x64xbf16>
    %c0_12 = arith.constant 0 : index
    %c0_13 = arith.constant 0 : index
    %c0_14 = arith.constant 0 : index
    %13 = vector.load %arg6[%c0_12, %c0_13, %c0_14] : memref<1x256x64xbf16, #tpu.memory_space<vmem>>, vector<1x256x64xbf16>
    %14 = vector.shape_cast %13 : vector<1x256x64xbf16> to vector<256x64xbf16>
    %15 = vector.shape_cast %12 : vector<256x64xbf16> to vector<1x256x64xbf16>
    tpu.vector_store %arg6[%c0_12, %c0_13, %c0_14], %15 {strides = array<i32>} : memref<1x256x64xbf16, #tpu.memory_space<vmem>>, vector<1x256x64xbf16>,
    return
  }
  func.func @transform_0(%arg0: i32, %arg1: i32, %arg2: i32) -> (i32, i32, i32) {
    %c0_i32 = arith.constant 0 : i32
    %c0_i32_0 = arith.constant 0 : i32
    return %arg0, %arg2, %c0_i32 : i32, i32, i32
  }
  func.func @transform_1(%arg0: i32, %arg1: i32, %arg2: i32) -> (i32, i32, i32) {
    %c0_i32 = arith.constant 0 : i32
    %c0_i32_0 = arith.constant 0 : i32
    %c0_i32_1 = arith.constant 0 : i32
    return %c0_i32, %c0_i32_0, %arg1 : i32, i32, i32
  }
  func.func @transform_2(%arg0: i32, %arg1: i32, %arg2: i32) -> (i32, i32) {
    %c0_i32 = arith.constant 0 : i32
    %c0_i32_0 = arith.constant 0 : i32
    return %c0_i32, %arg1 : i32, i32
  }
  func.func @transform_3(%arg0: i32, %arg1: i32, %arg2: i32) -> (i32, i32, i32) {
    %c0_i32 = arith.constant 0 : i32
    return %arg0, %arg2, %arg1 : i32, i32, i32
  }
}

</mosaic_0001>

<llo_original>
// kernel: tpu_custom_call.1
$region0: #{tpu_custom_call.1}
  #allocation0 [shape = 'u32[]', space=smem, size = 0x4, offset = 0x4, fixed_abs, tag = 'smem constant byte address 0x4 - core index']
  #allocation1 [shape = 'u32[144,128]{1,0:T(1,128)}', space=vmem, size = 0x12000, scoped, tag = 'internal scratch']
  #allocation2 [shape = 'f32[256,64]{1,0:T(8,128)}', space=vmem, size = 0x20000, scoped, tag = 'scratch operand']
  %s0 = inlined_call_operand.vmem [shape: bf16[2,320,27], index: 0, kind: input, shape index: {}]
  %s1 = inlined_call_operand.vmem [shape: bf16[1,27,64], index: 1, kind: input, shape index: {}]
  %s2 = inlined_call_operand.vmem [shape: f32[1,64], index: 2, kind: input, shape index: {}]
  %s3 = inlined_call_operand.vmem [shape: bf16[2,256,64], index: 3, kind: output, shape index: {}]
  %s4 = sld [smem:[#allocation0]]
  $region45: #{tpu_custom_call.1} parent=0
    _
  %s6 = ssub.s32 1, %s4
  %s7 = scalar_select 0, %s6, %s4
  loop: start=0, step=1, limit=4
  $region2: #{tpu_custom_call.1} parent=0 // loop_pre_header
    _
  $region3: #{tpu_custom_call.1} parent=0 // loop_header
    %s9 = sphi 0, %s13
    %p10 = scmp.ge.s32.totalorder %s9, 4
    %s16 = sphi 0, %s35
    %s17 = sphi 0, %s31
    %s18 = sphi 0, %s27
    %s19 = sphi 0, %s16
    %s20 = sphi 0, %s17
    %s21 = sphi 0, %s18
    %s22 = sphi 0, %s19
    %s23 = sphi 0, %s20
    %s24 = sphi 0, %s21
    %s40 = sphi 0, %s42
    %s43 = sphi 0, %s40
    %s44 = sphi 0, %s43
    %s60 = sphi 0, %s44
    %s66 = sphi 0, %s68
    %s69 = sphi 0, %s66
    %s70 = sphi 0, %s69
    %s86 = sphi 0, %s70
    %s92 = sphi 0, %s94
    %s95 = sphi 0, %s92
    %s96 = sphi 0, %s95
    %s112 = sphi 0, %s96
    %s122 = sphi 0, %s124
    %s125 = sphi 0, %s122
    %s126 = sphi 0, %s125
    %s142 = sphi 0, %s126
  $region4: #{tpu_custom_call.1} parent=0 // loop_header_branch
    %12 = sbr.rel (%p10) target = $region8
  $region5: #{tpu_custom_call.1} parent=0 // loop_body
    %s14 = ssub.s32 %s9, 1
    %s15 = ssub.s32 %s9, 2
    %s25 = sadd.s32 1, %s18
    %p26 = scmp.ge.s32.totalorder %s25, 1
    %s27 = scalar_select %p26, 0, %s25
    %s28 = sadd.s32 1, %s17
    %s29 = scalar_select %p26, %s28, %s17
    %p30 = scmp.ge.s32.totalorder %s29, 1
    %s31 = scalar_select %p30, 0, %s29
    %s32 = sadd.s32 1, %s16
    %s33 = scalar_select %p30, %s32, %s16
    %p34 = scmp.ge.s32.totalorder %s33, 2
    %s35 = scalar_select %p34, 0, %s33
    %s36 = ssub.s32 %s16, %s35
    %s37 = ssub.s32 %s18, %s27
    %s38 = sor.u32 %s36, %s37
    %p39 = scmp.eq.s32.totalorder %s38, 0
    %s41 = sadd.s32 %s40, 1
    %s42 = scalar_select %p39, %s40, %s41
    %p45 = pneg %p39
    %p46 = scmp.eq.s32.totalorder %s9, 1
    %p47 = por %p45, %p46
    %p48 = scmp.ne.s32.totalorder %s40, %s43
    %p49 = scmp.eq.s32.totalorder %s9, 0
    %p50 = por %p48, %p49
    %p51 = scmp.ne.s32.totalorder %s40, %s43
    %p52 = scmp.eq.s32.totalorder %s14, 1
    %p53 = por %p51, %p52
    %p54 = scmp.ne.s32.totalorder %s43, %s44
    %p55 = scmp.eq.s32.totalorder %s14, 0
    %p56 = por %p54, %p55
    %p57 = scmp.ne.s32.totalorder %s43, %s44
    %p58 = scmp.eq.s32.totalorder %s15, 1
    %p59 = por %p57, %p58
    %p61 = scmp.ne.s32.totalorder %s44, %s60
    %p62 = scmp.eq.s32.totalorder %s15, 0
    %p63 = por %p61, %p62
    %s64 = ssub.s32 %s17, %s31
    %p65 = scmp.eq.s32.totalorder %s64, 0
    %s67 = sadd.s32 %s66, 1
    %s68 = scalar_select %p65, %s66, %s67
    %p71 = pneg %p65
    %p72 = scmp.eq.s32.totalorder %s9, 1
    %p73 = por %p71, %p72
    %p74 = scmp.ne.s32.totalorder %s66, %s69
    %p75 = scmp.eq.s32.totalorder %s9, 0
    %p76 = por %p74, %p75
    %p77 = scmp.ne.s32.totalorder %s66, %s69
    %p78 = scmp.eq.s32.totalorder %s14, 1
    %p79 = por %p77, %p78
    %p80 = scmp.ne.s32.totalorder %s69, %s70
    %p81 = scmp.eq.s32.totalorder %s14, 0
    %p82 = por %p80, %p81
    %p83 = scmp.ne.s32.totalorder %s69, %s70
    %p84 = scmp.eq.s32.totalorder %s15, 1
    %p85 = por %p83, %p84
    %p87 = scmp.ne.s32.totalorder %s70, %s86
    %p88 = scmp.eq.s32.totalorder %s15, 0
    %p89 = por %p87, %p88
    %s90 = ssub.s32 %s17, %s31
    %p91 = scmp.eq.s32.totalorder %s90, 0
    %s93 = sadd.s32 %s92, 1
    %s94 = scalar_select %p91, %s92, %s93
    %p97 = pneg %p91
    %p98 = scmp.eq.s32.totalorder %s9, 1
    %p99 = por %p97, %p98
    %p100 = scmp.ne.s32.totalorder %s92, %s95
    %p101 = scmp.eq.s32.totalorder %s9, 0
    %p102 = por %p100, %p101
    %p103 = scmp.ne.s32.totalorder %s92, %s95
    %p104 = scmp.eq.s32.totalorder %s14, 1
    %p105 = por %p103, %p104
    %p106 = scmp.ne.s32.totalorder %s95, %s96
    %p107 = scmp.eq.s32.totalorder %s14, 0
    %p108 = por %p106, %p107
    %p109 = scmp.ne.s32.totalorder %s95, %s96
    %p110 = scmp.eq.s32.totalorder %s15, 1
    %p111 = por %p109, %p110
    %p113 = scmp.ne.s32.totalorder %s96, %s112
    %p114 = scmp.eq.s32.totalorder %s15, 0
    %p115 = por %p113, %p114
    %s116 = ssub.s32 %s16, %s35
    %s117 = ssub.s32 %s18, %s27
    %s118 = sor.u32 %s116, %s117
    %s119 = ssub.s32 %s17, %s31
    %s120 = sor.u32 %s118, %s119
    %p121 = scmp.eq.s32.totalorder %s120, 0
    %s123 = sadd.s32 %s122, 1
    %s124 = scalar_select %p121, %s122, %s123
    %p127 = pneg %p121
    %p128 = scmp.eq.s32.totalorder %s9, 1
    %p129 = por %p127, %p128
    %p130 = scmp.ne.s32.totalorder %s122, %s125
    %p131 = scmp.eq.s32.totalorder %s9, 0
    %p132 = por %p130, %p131
    %p133 = scmp.ne.s32.totalorder %s122, %s125
    %p134 = scmp.eq.s32.totalorder %s14, 1
    %p135 = por %p133, %p134
    %p136 = scmp.ne.s32.totalorder %s125, %s126
    %p137 = scmp.eq.s32.totalorder %s14, 0
    %p138 = por %p136, %p137
    %p139 = scmp.ne.s32.totalorder %s125, %s126
    %p140 = scmp.eq.s32.totalorder %s15, 1
    %p141 = por %p139, %p140
    %p143 = scmp.ne.s32.totalorder %s126, %s142
    %p144 = scmp.eq.s32.totalorder %s15, 0
    %p145 = por %p143, %p144
    %p146 = scmp.le.s32.totalorder 1, %s9
    %p147 = scmp.lt.s32.totalorder %s9, 3
    %p148 = pnand %p146, %p147
    %p149 = pneg %p148
    // Predicated region
    $region9: #{tpu_custom_call.1} parent=5 // pred_check
      _
    $region10: #{tpu_custom_call.1} parent=5 // pred_check_branch
      %151 = sbr.rel (%p148) target = $region12
    $region11: #{tpu_custom_call.1} parent=5 // pred_region
      %s152 = ssub.s32 %s9, 1
      // Predicated region
      $region13: #{tpu_custom_call.1} parent=11 // pred_check
        %p153 = pneg %p82
      $region14: #{tpu_custom_call.1} parent=11 // pred_check_branch
        %155 = sbr.rel (%p153) target = $region16
      $region15: #{tpu_custom_call.1} parent=11 // pred_region
        %p156 = scmp.lt.s32.totalorder %s20, 0
        %s157 = scalar_select %p156, %s20, 0
        %s158 = smul.addr %s157, 4
        %s159 = scalar_lea.vmem %s1, %s158
      $region16: #{tpu_custom_call.1} parent=11 // pred_fallthru
        _
      // Predicated region
      $region17: #{tpu_custom_call.1} parent=11 // pred_check
        %p160 = pneg %p108
      $region18: #{tpu_custom_call.1} parent=11 // pred_check_branch
        %162 = sbr.rel (%p160) target = $region20
      $region19: #{tpu_custom_call.1} parent=11 // pred_region
        %p163 = scmp.lt.s32.totalorder %s20, 0
        %s164 = scalar_select %p163, %s20, 0
        %s165 = scalar_lea.vmem %s2, %s164
      $region20: #{tpu_custom_call.1} parent=11 // pred_fallthru
        _
    $region12: #{tpu_custom_call.1} parent=5 // pred_fallthru
      _
    %p166 = scmp.lt.s32.totalorder %s9, 2
    // Predicated region
    $region21: #{tpu_custom_call.1} parent=5 // pred_check
      %p167 = pneg %p166
    $region22: #{tpu_custom_call.1} parent=5 // pred_check_branch
      %169 = sbr.rel (%p167) target = $region24
    $region23: #{tpu_custom_call.1} parent=5 // pred_region
      // Predicated region
      $region25: #{tpu_custom_call.1} parent=23 // pred_check
        %p170 = pneg %p50
      $region26: #{tpu_custom_call.1} parent=23 // pred_check_branch
        %172 = sbr.rel (%p170) target = $region28
      $region27: #{tpu_custom_call.1} parent=23 // pred_region
        %s173 = smul.u32 32, %s18
        %s174 = ssub.s32 40, %s173
        %p175 = scmp.lt.s32.totalorder %s174, 32
        %s176 = scalar_select %p175, %s174, 32
        %s177 = smul.u32 64, %s176
        %p178 = scmp.lt.s32.totalorder %s16, 1
        %s179 = scalar_select %p178, %s16, 1
        %p180 = scmp.lt.s32.totalorder %s173, 39
        %s181 = scalar_select %p180, %s173, 39
        %s182 = smul.addr %s179, 40
        %s183 = sadd.s32 %s181, %s182
        %s184 = smul.addr %s183, 4
        %s185 = scalar_lea.vmem %s0, %s184
        %s186 = smul.u32 32, %s18
        %s187 = ssub.s32 40, %s186
        %p188 = scmp.lt.s32.totalorder %s187, 32
        %s189 = scalar_select %p188, %s187, 32
        %s190 = smul.u32 64, %s189
      $region28: #{tpu_custom_call.1} parent=23 // pred_fallthru
        _
    $region24: #{tpu_custom_call.1} parent=5 // pred_fallthru
      _
    %p191 = scmp.le.s32.totalorder 1, %s9
    %p192 = scmp.lt.s32.totalorder %s9, 3
    %p193 = pnand %p191, %p192
    %p194 = pneg %p193
    // Predicated region
    $region29: #{tpu_custom_call.1} parent=5 // pred_check
      _
    $region30: #{tpu_custom_call.1} parent=5 // pred_check_branch
      %196 = sbr.rel (%p193) target = $region32
    $region31: #{tpu_custom_call.1} parent=5 // pred_region
      %s197 = ssub.s32 %s9, 1
      %s198 = smul.u32 32, %s21
      %s199 = ssub.s32 40, %s198
      %p200 = scmp.lt.s32.totalorder %s199, 32
      %s201 = scalar_select %p200, %s199, 32
      %s202 = smul.u32 64, %s201
      %p203 = scmp.lt.s32.totalorder %s19, 1
      %s204 = scalar_select %p203, %s19, 1
      %p205 = scmp.lt.s32.totalorder %s198, 39
      %s206 = scalar_select %p205, %s198, 39
      %s207 = smul.addr %s204, 40
      %s208 = sadd.s32 %s206, %s207
      %s209 = smul.addr %s208, 4
      %s210 = scalar_lea.vmem %s0, %s209
      %p211 = pneg %p56
      %p212 = pneg %p53
      %p213 = scmp.lt.s32.totalorder %s20, 0
      %s214 = scalar_select %p213, %s20, 0
      %s215 = smul.addr %s214, 4
      %s216 = scalar_lea.vmem %s1, %s215
      %p217 = pneg %p82
      %p218 = pneg %p79
      %p219 = scmp.lt.s32.totalorder %s20, 0
      %s220 = scalar_select %p219, %s20, 0
      %s221 = scalar_lea.vmem %s2, %s220
      %p222 = pneg %p108
      %p223 = pneg %p105
      %p224 = pneg %p138
      %p225 = pneg %p135
      %s226 = smul.u32 32, %s21
      %p227 = scmp.lt.s32.totalorder %s19, 1
      %s228 = scalar_select %p227, %s19, 1
      %p229 = scmp.lt.s32.totalorder %s226, 31
      %s230 = scalar_select %p229, %s226, 31
      %p231 = scmp.lt.s32.totalorder %s20, 0
      %s232 = scalar_select %p231, %s20, 0
      %s233 = sadd.s32 %s232, %s230
      %s234 = smul.addr %s228, 32
      %s235 = sadd.s32 %s233, %s234
      %s236 = smul.addr %s235, 4
      %s237 = scalar_lea.vmem %s3, %s236
      %s238 = smul.u32 32, %s21
      %s239 = ssub.s32 40, %s238
      %p240 = scmp.lt.s32.totalorder %s239, 32
      %s241 = scalar_select %p240, %s239, 32
      %s242 = smul.u32 64, %s241
      %p243 = scmp.lt.s32.totalorder %s19, 1
      %s244 = scalar_select %p243, %s19, 1
      %p245 = scmp.lt.s32.totalorder %s238, 39
      %s246 = scalar_select %p245, %s238, 39
      %s247 = smul.addr %s244, 40
      %s248 = sadd.s32 %s246, %s247
      %s249 = smul.addr %s248, 4
      %s250 = scalar_lea.vmem %s0, %s249
      %s251 = smul.u32 32, %s21
      %s252 = ssub.s32 40, %s251
      %p253 = scmp.lt.s32.totalorder %s252, 32
      %s254 = scalar_select %p253, %s252, 32
      %s255 = smul.u32 64, %s254
      %p256 = scmp.lt.s32.totalorder %s20, 0
      %s257 = scalar_select %p256, %s20, 0
      %s258 = smul.addr %s257, 4
      %s259 = scalar_lea.vmem %s1, %s258
      %p260 = scmp.lt.s32.totalorder %s20, 0
      %s261 = scalar_select %p260, %s20, 0
      %s262 = scalar_lea.vmem %s2, %s261
      %s263 = smul.u32 32, %s21
      %p264 = scmp.lt.s32.totalorder %s19, 1
      %s265 = scalar_select %p264, %s19, 1
      %p266 = scmp.lt.s32.totalorder %s263, 31
      %s267 = scalar_select %p266, %s263, 31
      %p268 = scmp.lt.s32.totalorder %s20, 0
      %s269 = scalar_select %p268, %s20, 0
      %s270 = sadd.s32 %s269, %s267
      %s271 = smul.addr %s265, 32
      %s272 = sadd.s32 %s270, %s271
      %s273 = smul.addr %s272, 4
      %s274 = scalar_lea.vmem %s3, %s273
      %s275 = smul.u32 32, %s21
      %v277 = vld [vmem:[%s250] sm:$0xf]
      %v278 = vld [vmem:[%s250 + $0x4] sm:$0xf]
      %v279 = vld [vmem:[%s250 + $0x8] sm:$0xf]
      %v280 = vld [vmem:[%s250 + $0xc] sm:$0xf]
      %v281 = vld [vmem:[%s250 + $0x10] sm:$0xf]
      %v282 = vld [vmem:[%s250 + $0x14] sm:$0xf]
      %v283 = vld [vmem:[%s250 + $0x18] sm:$0xf]
      %v284 = vld [vmem:[%s250 + $0x1c] sm:$0xf]
      %v285 = vld [vmem:[%s250 + $0x20] sm:$0xf]
      %v286 = vld [vmem:[%s250 + $0x24] sm:$0xf]
      %v287 = vld [vmem:[%s250 + $0x28] sm:$0xf]
      %v288 = vld [vmem:[%s250 + $0x2c] sm:$0xf]
      %v289 = vld [vmem:[%s250 + $0x30] sm:$0xf]
      %v290 = vld [vmem:[%s250 + $0x34] sm:$0xf]
      %v291 = vld [vmem:[%s250 + $0x38] sm:$0xf]
      %v292 = vld [vmem:[%s250 + $0x3c] sm:$0xf]
      %v293 = vld [vmem:[%s250 + $0x40] sm:$0xf]
      %v294 = vld [vmem:[%s250 + $0x44] sm:$0xf]
      %v295 = vld [vmem:[%s250 + $0x48] sm:$0xf]
      %v296 = vld [vmem:[%s250 + $0x4c] sm:$0xf]
      %v297 = vld [vmem:[%s250 + $0x50] sm:$0xf]
      %v298 = vld [vmem:[%s250 + $0x54] sm:$0xf]
      %v299 = vld [vmem:[%s250 + $0x58] sm:$0xf]
      %v300 = vld [vmem:[%s250 + $0x5c] sm:$0xf]
      %v301 = vld [vmem:[%s250 + $0x60] sm:$0xf]
      %v302 = vld [vmem:[%s250 + $0x64] sm:$0xf]
      %v303 = vld [vmem:[%s250 + $0x68] sm:$0xf]
      %v304 = vld [vmem:[%s250 + $0x6c] sm:$0xf]
      %v305 = vld [vmem:[%s250 + $0x70] sm:$0xf]
      %v306 = vld [vmem:[%s250 + $0x74] sm:$0xf]
      %v307 = vld [vmem:[%s250 + $0x78] sm:$0xf]
      %v308 = vld [vmem:[%s250 + $0x7c] sm:$0xf]
      %v309 = vld [vmem:[%s259] sm:$0xf]
      %v310 = vld [vmem:[%s259 + $0x4] sm:$0xf]
      %v311 = vld [vmem:[%s259 + $0x8] sm:$0xf]
      %v312 = vld [vmem:[%s259 + $0xc] sm:$0x3]
      %v345 = vunpack.c.l.b16 %v277
      %v346 = vunpack.c.l.b16 %v278
      %v347 = vunpack.c.l.b16 %v279
      %v348 = vunpack.c.l.b16 %v280
      %v349 = vunpack.c.l.b16 %v281
      %v350 = vunpack.c.l.b16 %v282
      %v351 = vunpack.c.l.b16 %v283
      %v352 = vunpack.c.l.b16 %v284
      %v353 = vunpack.c.l.b16 %v285
      %v354 = vunpack.c.l.b16 %v286
      %v355 = vunpack.c.l.b16 %v287
      %v356 = vunpack.c.l.b16 %v288
      %v357 = vunpack.c.l.b16 %v289
      %v358 = vunpack.c.l.b16 %v290
      %v359 = vunpack.c.l.b16 %v291
      %v360 = vunpack.c.l.b16 %v292
      %v361 = vunpack.c.l.b16 %v293
      %v362 = vunpack.c.l.b16 %v294
      %v363 = vunpack.c.l.b16 %v295
      %v364 = vunpack.c.l.b16 %v296
      %v365 = vunpack.c.l.b16 %v297
      %v366 = vunpack.c.l.b16 %v298
      %v367 = vunpack.c.l.b16 %v299
      %v368 = vunpack.c.l.b16 %v300
      %v369 = vunpack.c.l.b16 %v301
      %v370 = vunpack.c.l.b16 %v302
      %v371 = vunpack.c.l.b16 %v303
      %v372 = vunpack.c.l.b16 %v304
      %v373 = vunpack.c.l.b16 %v305
      %v374 = vunpack.c.l.b16 %v306
      %v375 = vunpack.c.l.b16 %v307
      %v376 = vunpack.c.l.b16 %v308
      %v377 = vpack.c.b16 %v346, %v345
      %v378 = vpack.c.b16 %v348, %v347
      %v379 = vpack.c.b16 %v350, %v349
      %v380 = vpack.c.b16 %v352, %v351
      %v381 = vpack.c.b16 %v354, %v353
      %v382 = vpack.c.b16 %v356, %v355
      %v383 = vpack.c.b16 %v358, %v357
      %v384 = vpack.c.b16 %v360, %v359
      %v385 = vpack.c.b16 %v362, %v361
      %v386 = vpack.c.b16 %v364, %v363
      %v387 = vpack.c.b16 %v366, %v365
      %v388 = vpack.c.b16 %v368, %v367
      %v389 = vpack.c.b16 %v370, %v369
      %v390 = vpack.c.b16 %v372, %v371
      %v391 = vpack.c.b16 %v374, %v373
      %v392 = vpack.c.b16 %v376, %v375
      %v397 = vunpack.c.l.b16 %v309
      %v398 = vunpack.c.l.b16 %v310
      %v399 = vunpack.c.l.b16 %v311
      %v400 = vunpack.c.l.b16 %v312
      %v401 = vpack.c.b16 %v398, %v397
      %v402 = vpack.c.b16 %v400, %v399
      %vm404 = vcmask 220160
      %v406 = vsel %vm404, %v377, 0
      %v409 = vsel %vm404, %v378, 0
      %v412 = vsel %vm404, %v379, 0
      %v415 = vsel %vm404, %v380, 0
      %v418 = vsel %vm404, %v381, 0
      %v421 = vsel %vm404, %v382, 0
      %v424 = vsel %vm404, %v383, 0
      %v427 = vsel %vm404, %v384, 0
      %v430 = vsel %vm404, %v385, 0
      %v433 = vsel %vm404, %v386, 0
      %v436 = vsel %vm404, %v387, 0
      %v439 = vsel %vm404, %v388, 0
      %v442 = vsel %vm404, %v389, 0
      %v445 = vsel %vm404, %v390, 0
      %v448 = vsel %vm404, %v391, 0
      %v451 = vsel %vm404, %v392, 0
      %vm453 = vcmask 1044480
      %vm454 = vcmask 1045504
      %v455 = vsel %vm453, 4294967295, 65535
      %v456 = vsel %vm454, %v455, 0
      %v458 = vand.u32 %v402, %v456
      %460 = vmatprep.subr.bf16.mxu0 0
      %461 = vmatpush1.bf16.msra.mxu0 %v401
      %462 = vmatprep.subr.bf16.mxu0 0
      %463 = vmatpush1.bf16.msra.mxu0 %v458
      %464 = vmatprep.subr.bf16.mxu0 0
      %465 = vmatpush1.bf16.msra.mxu0 0
      %466 = vmatprep.subr.bf16.mxu0 0
      %467 = vmatpush1.bf16.msra.mxu0 0
      %468 = vmatprep.subr.bf16.mxu0 0
      %469 = vmatpush1.bf16.msra.mxu0 0
      %470 = vmatprep.subr.bf16.mxu0 0
      %471 = vmatpush1.bf16.msra.mxu0 0
      %472 = vmatprep.subr.bf16.mxu0 0
      %473 = vmatpush1.bf16.msra.mxu0 0
      %474 = vmatprep.subr.bf16.mxu0 0
      %475 = vmatpush1.bf16.msra.mxu0 0
      %476 = vmatprep.subr.bf16.mxu0 0
      %477 = vmatpush1.bf16.msra.mxu0 0
      %478 = vmatprep.subr.bf16.mxu0 0
      %479 = vmatpush1.bf16.msra.mxu0 0
      %480 = vmatprep.subr.bf16.mxu0 0
      %481 = vmatpush1.bf16.msra.mxu0 0
      %482 = vmatprep.subr.bf16.mxu0 0
      %483 = vmatpush1.bf16.msra.mxu0 0
      %484 = vmatprep.subr.bf16.mxu0 0
      %485 = vmatpush1.bf16.msra.mxu0 0
      %486 = vmatprep.subr.bf16.mxu0 0
      %487 = vmatpush1.bf16.msra.mxu0 0
      %488 = vmatprep.subr.bf16.mxu0 0
      %489 = vmatpush1.bf16.msra.mxu0 0
      %490 = vmatprep.subr.bf16.mxu0 0
      %491 = vmatpush1.bf16.msra.mxu0 0
      %492 = vmatprep.mubr.bf16.mxu0 0
      %493 = vmatmul.mubr.bf16.gmra.mrb[0].mxu0 %v406
      %v494 = vpop.f32.mrb[0].mxu0
      %v495 = vadd.f32 0.0, %v494
      %v496 = vpop.f32.mrb[0].mxu0
      %v497 = vpop.f32.mrb[0].mxu0
      %v498 = vadd.f32 0.0, %v497
      %v499 = vpop.f32.mrb[0].mxu0
      %500 = vmatprep.mubr.bf16.mxu0 0
      %501 = vmatmul.mubr.bf16.gmra.mrb[0].mxu0 %v409
      %v502 = vpop.f32.mrb[0].mxu0
      %v503 = vadd.f32 0.0, %v502
      %v504 = vpop.f32.mrb[0].mxu0
      %v505 = vpop.f32.mrb[0].mxu0
      %v506 = vadd.f32 0.0, %v505
      %v507 = vpop.f32.mrb[0].mxu0
      %508 = vmatprep.mubr.bf16.mxu0 0
      %509 = vmatmul.mubr.bf16.gmra.mrb[0].mxu0 %v412
      %v510 = vpop.f32.mrb[0].mxu0
      %v511 = vadd.f32 0.0, %v510
      %v512 = vpop.f32.mrb[0].mxu0
      %v513 = vpop.f32.mrb[0].mxu0
      %v514 = vadd.f32 0.0, %v513
      %v515 = vpop.f32.mrb[0].mxu0
      %516 = vmatprep.mubr.bf16.mxu0 0
      %517 = vmatmul.mubr.bf16.gmra.mrb[0].mxu0 %v415
      %v518 = vpop.f32.mrb[0].mxu0
      %v519 = vadd.f32 0.0, %v518
      %v520 = vpop.f32.mrb[0].mxu0
      %v521 = vpop.f32.mrb[0].mxu0
      %v522 = vadd.f32 0.0, %v521
      %v523 = vpop.f32.mrb[0].mxu0
      %524 = vmatprep.mubr.bf16.mxu0 0
      %525 = vmatmul.mubr.bf16.gmra.mrb[0].mxu0 %v418
      %v526 = vpop.f32.mrb[0].mxu0
      %v527 = vadd.f32 0.0, %v526
      %v528 = vpop.f32.mrb[0].mxu0
      %v529 = vpop.f32.mrb[0].mxu0
      %v530 = vadd.f32 0.0, %v529
      %v531 = vpop.f32.mrb[0].mxu0
      %532 = vmatprep.mubr.bf16.mxu0 0
      %533 = vmatmul.mubr.bf16.gmra.mrb[0].mxu0 %v421
      %v534 = vpop.f32.mrb[0].mxu0
      %v535 = vadd.f32 0.0, %v534
      %v536 = vpop.f32.mrb[0].mxu0
      %v537 = vpop.f32.mrb[0].mxu0
      %v538 = vadd.f32 0.0, %v537
      %v539 = vpop.f32.mrb[0].mxu0
      %540 = vmatprep.mubr.bf16.mxu0 0
      %541 = vmatmul.mubr.bf16.gmra.mrb[0].mxu0 %v424
      %v542 = vpop.f32.mrb[0].mxu0
      %v543 = vadd.f32 0.0, %v542
      %v544 = vpop.f32.mrb[0].mxu0
      %v545 = vpop.f32.mrb[0].mxu0
      %v546 = vadd.f32 0.0, %v545
      %v547 = vpop.f32.mrb[0].mxu0
      %548 = vmatprep.mubr.bf16.mxu0 0
      %549 = vmatmul.mubr.bf16.gmra.mrb[0].mxu0 %v427
      %v550 = vpop.f32.mrb[0].mxu0
      %v551 = vadd.f32 0.0, %v550
      %v552 = vpop.f32.mrb[0].mxu0
      %v553 = vpop.f32.mrb[0].mxu0
      %v554 = vadd.f32 0.0, %v553
      %v555 = vpop.f32.mrb[0].mxu0
      %556 = vmatprep.mubr.bf16.mxu0 0
      %557 = vmatmul.mubr.bf16.gmra.mrb[0].mxu0 %v430
      %v558 = vpop.f32.mrb[0].mxu0
      %v559 = vadd.f32 0.0, %v558
      %v560 = vpop.f32.mrb[0].mxu0
      %v561 = vpop.f32.mrb[0].mxu0
      %v562 = vadd.f32 0.0, %v561
      %v563 = vpop.f32.mrb[0].mxu0
      %564 = vmatprep.mubr.bf16.mxu0 0
      %565 = vmatmul.mubr.bf16.gmra.mrb[0].mxu0 %v433
      %v566 = vpop.f32.mrb[0].mxu0
      %v567 = vadd.f32 0.0, %v566
      %v568 = vpop.f32.mrb[0].mxu0
      %v569 = vpop.f32.mrb[0].mxu0
      %v570 = vadd.f32 0.0, %v569
      %v571 = vpop.f32.mrb[0].mxu0
      %572 = vmatprep.mubr.bf16.mxu0 0
      %573 = vmatmul.mubr.bf16.gmra.mrb[0].mxu0 %v436
      %v574 = vpop.f32.mrb[0].mxu0
      %v575 = vadd.f32 0.0, %v574
      %v576 = vpop.f32.mrb[0].mxu0
      %v577 = vpop.f32.mrb[0].mxu0
      %v578 = vadd.f32 0.0, %v577
      %v579 = vpop.f32.mrb[0].mxu0
      %580 = vmatprep.mubr.bf16.mxu0 0
      %581 = vmatmul.mubr.bf16.gmra.mrb[0].mxu0 %v439
      %v582 = vpop.f32.mrb[0].mxu0
      %v583 = vadd.f32 0.0, %v582
      %v584 = vpop.f32.mrb[0].mxu0
      %v585 = vpop.f32.mrb[0].mxu0
      %v586 = vadd.f32 0.0, %v585
      %v587 = vpop.f32.mrb[0].mxu0
      %588 = vmatprep.mubr.bf16.mxu0 0
      %589 = vmatmul.mubr.bf16.gmra.mrb[0].mxu0 %v442
      %v590 = vpop.f32.mrb[0].mxu0
      %v591 = vadd.f32 0.0, %v590
      %v592 = vpop.f32.mrb[0].mxu0
      %v593 = vpop.f32.mrb[0].mxu0
      %v594 = vadd.f32 0.0, %v593
      %v595 = vpop.f32.mrb[0].mxu0
      %596 = vmatprep.mubr.bf16.mxu0 0
      %597 = vmatmul.mubr.bf16.gmra.mrb[0].mxu0 %v445
      %v598 = vpop.f32.mrb[0].mxu0
      %v599 = vadd.f32 0.0, %v598
      %v600 = vpop.f32.mrb[0].mxu0
      %v601 = vpop.f32.mrb[0].mxu0
      %v602 = vadd.f32 0.0, %v601
      %v603 = vpop.f32.mrb[0].mxu0
      %604 = vmatprep.mubr.bf16.mxu0 0
      %605 = vmatmul.mubr.bf16.gmra.mrb[0].mxu0 %v448
      %v606 = vpop.f32.mrb[0].mxu0
      %v607 = vadd.f32 0.0, %v606
      %v608 = vpop.f32.mrb[0].mxu0
      %v609 = vpop.f32.mrb[0].mxu0
      %v610 = vadd.f32 0.0, %v609
      %v611 = vpop.f32.mrb[0].mxu0
      %612 = vmatprep.mubr.bf16.mxu0 0
      %613 = vmatmul.mubr.bf16.gmra.mrb[0].mxu0 %v451
      %v614 = vpop.f32.mrb[0].mxu0
      %v615 = vadd.f32 0.0, %v614
      %v616 = vpop.f32.mrb[0].mxu0
      %v617 = vpop.f32.mrb[0].mxu0
      %v618 = vadd.f32 0.0, %v617
      %v619 = vpop.f32.mrb[0].mxu0
      %620 = vdwg.mxu0
      %vm621 = vcmask 523264
      %622 = vst.msk [vmem:[#allocation2] sm:$0xff] %vm621, %v495
      %623 = vst.msk [vmem:[#allocation2 + $0x8] sm:$0xff] %vm621, %v498
      %624 = vst.msk [vmem:[#allocation2 + $0x10] sm:$0xff] %vm621, %v503
      %625 = vst.msk [vmem:[#allocation2 + $0x18] sm:$0xff] %vm621, %v506
      %626 = vst.msk [vmem:[#allocation2 + $0x20] sm:$0xff] %vm621, %v511
      %627 = vst.msk [vmem:[#allocation2 + $0x28] sm:$0xff] %vm621, %v514
      %628 = vst.msk [vmem:[#allocation2 + $0x30] sm:$0xff] %vm621, %v519
      %629 = vst.msk [vmem:[#allocation2 + $0x38] sm:$0xff] %vm621, %v522
      %630 = vst.msk [vmem:[#allocation2 + $0x40] sm:$0xff] %vm621, %v527
      %631 = vst.msk [vmem:[#allocation2 + $0x48] sm:$0xff] %vm621, %v530
      %632 = vst.msk [vmem:[#allocation2 + $0x50] sm:$0xff] %vm621, %v535
      %633 = vst.msk [vmem:[#allocation2 + $0x58] sm:$0xff] %vm621, %v538
      %634 = vst.msk [vmem:[#allocation2 + $0x60] sm:$0xff] %vm621, %v543
      %635 = vst.msk [vmem:[#allocation2 + $0x68] sm:$0xff] %vm621, %v546
      %636 = vst.msk [vmem:[#allocation2 + $0x70] sm:$0xff] %vm621, %v551
      %637 = vst.msk [vmem:[#allocation2 + $0x78] sm:$0xff] %vm621, %v554
      %638 = vst.msk [vmem:[#allocation2 + $0x80] sm:$0xff] %vm621, %v559
      %639 = vst.msk [vmem:[#allocation2 + $0x88] sm:$0xff] %vm621, %v562
      %640 = vst.msk [vmem:[#allocation2 + $0x90] sm:$0xff] %vm621, %v567
      %641 = vst.msk [vmem:[#allocation2 + $0x98] sm:$0xff] %vm621, %v570
      %642 = vst.msk [vmem:[#allocation2 + $0xa0] sm:$0xff] %vm621, %v575
      %643 = vst.msk [vmem:[#allocation2 + $0xa8] sm:$0xff] %vm621, %v578
      %644 = vst.msk [vmem:[#allocation2 + $0xb0] sm:$0xff] %vm621, %v583
      %645 = vst.msk [vmem:[#allocation2 + $0xb8] sm:$0xff] %vm621, %v586
      %646 = vst.msk [vmem:[#allocation2 + $0xc0] sm:$0xff] %vm621, %v591
      %647 = vst.msk [vmem:[#allocation2 + $0xc8] sm:$0xff] %vm621, %v594
      %648 = vst.msk [vmem:[#allocation2 + $0xd0] sm:$0xff] %vm621, %v599
      %649 = vst.msk [vmem:[#allocation2 + $0xd8] sm:$0xff] %vm621, %v602
      %650 = vst.msk [vmem:[#allocation2 + $0xe0] sm:$0xff] %vm621, %v607
      %651 = vst.msk [vmem:[#allocation2 + $0xe8] sm:$0xff] %vm621, %v610
      %652 = vst.msk [vmem:[#allocation2 + $0xf0] sm:$0xff] %vm621, %v615
      %653 = vst.msk [vmem:[#allocation2 + $0xf8] sm:$0xff] %vm621, %v618
      %v654 = vld [vmem:[#allocation2] sm:$0xff]
      %v655 = vld [vmem:[#allocation2 + $0x8] sm:$0xff]
      %v656 = vld [vmem:[#allocation2 + $0x10] sm:$0xff]
      %v657 = vld [vmem:[#allocation2 + $0x18] sm:$0xff]
      %v658 = vld [vmem:[#allocation2 + $0x20] sm:$0xff]
      %v659 = vld [vmem:[#allocation2 + $0x28] sm:$0xff]
      %v660 = vld [vmem:[#allocation2 + $0x30] sm:$0xff]
      %v661 = vld [vmem:[#allocation2 + $0x38] sm:$0xff]
      %v662 = vld [vmem:[#allocation2 + $0x40] sm:$0xff]
      %v663 = vld [vmem:[#allocation2 + $0x48] sm:$0xff]
      %v664 = vld [vmem:[#allocation2 + $0x50] sm:$0xff]
      %v665 = vld [vmem:[#allocation2 + $0x58] sm:$0xff]
      %v666 = vld [vmem:[#allocation2 + $0x60] sm:$0xff]
      %v667 = vld [vmem:[#allocation2 + $0x68] sm:$0xff]
      %v668 = vld [vmem:[#allocation2 + $0x70] sm:$0xff]
      %v669 = vld [vmem:[#allocation2 + $0x78] sm:$0xff]
      %v670 = vld [vmem:[#allocation2 + $0x80] sm:$0xff]
      %v671 = vld [vmem:[#allocation2 + $0x88] sm:$0xff]
      %v672 = vld [vmem:[#allocation2 + $0x90] sm:$0xff]
      %v673 = vld [vmem:[#allocation2 + $0x98] sm:$0xff]
      %v674 = vld [vmem:[#allocation2 + $0xa0] sm:$0xff]
      %v675 = vld [vmem:[#allocation2 + $0xa8] sm:$0xff]
      %v676 = vld [vmem:[#allocation2 + $0xb0] sm:$0xff]
      %v677 = vld [vmem:[#allocation2 + $0xb8] sm:$0xff]
      %v678 = vld [vmem:[#allocation2 + $0xc0] sm:$0xff]
      %v679 = vld [vmem:[#allocation2 + $0xc8] sm:$0xff]
      %v680 = vld [vmem:[#allocation2 + $0xd0] sm:$0xff]
      %v681 = vld [vmem:[#allocation2 + $0xd8] sm:$0xff]
      %v682 = vld [vmem:[#allocation2 + $0xe0] sm:$0xff]
      %v683 = vld [vmem:[#allocation2 + $0xe8] sm:$0xff]
      %v684 = vld [vmem:[#allocation2 + $0xf0] sm:$0xff]
      %v685 = vld [vmem:[#allocation2 + $0xf8] sm:$0xff]
      %v686 = vld [vmem:[%s262] sm:$0x1]
      %v688 = vlaneseq
      %v689 = vshrl.u32 %v688, 7
      %v690 = vsub.s32 0, %v689
      %v691 = vrot.slane %v686, %v690
      %v693 = vadd.f32 %v654, %v691
      %v694 = vadd.f32 %v655, %v691
      %v695 = vadd.f32 %v656, %v691
      %v696 = vadd.f32 %v657, %v691
      %v697 = vadd.f32 %v658, %v691
      %v698 = vadd.f32 %v659, %v691
      %v699 = vadd.f32 %v660, %v691
      %v700 = vadd.f32 %v661, %v691
      %v701 = vadd.f32 %v662, %v691
      %v702 = vadd.f32 %v663, %v691
      %v703 = vadd.f32 %v664, %v691
      %v704 = vadd.f32 %v665, %v691
      %v705 = vadd.f32 %v666, %v691
      %v706 = vadd.f32 %v667, %v691
      %v707 = vadd.f32 %v668, %v691
      %v708 = vadd.f32 %v669, %v691
      %v709 = vadd.f32 %v670, %v691
      %v710 = vadd.f32 %v671, %v691
      %v711 = vadd.f32 %v672, %v691
      %v712 = vadd.f32 %v673, %v691
      %v713 = vadd.f32 %v674, %v691
      %v714 = vadd.f32 %v675, %v691
      %v715 = vadd.f32 %v676, %v691
      %v716 = vadd.f32 %v677, %v691
      %v717 = vadd.f32 %v678, %v691
      %v718 = vadd.f32 %v679, %v691
      %v719 = vadd.f32 %v680, %v691
      %v720 = vadd.f32 %v681, %v691
      %v721 = vadd.f32 %v682, %v691
      %v722 = vadd.f32 %v683, %v691
      %v723 = vadd.f32 %v684, %v691
      %v724 = vadd.f32 %v685, %v691
      %v725 = vmax.f32 %v693, 0.0
      %v726 = vmax.f32 %v694, 0.0
      %v727 = vmax.f32 %v695, 0.0
      %v728 = vmax.f32 %v696, 0.0
      %v729 = vmax.f32 %v697, 0.0
      %v730 = vmax.f32 %v698, 0.0
      %v731 = vmax.f32 %v699, 0.0
      %v732 = vmax.f32 %v700, 0.0
      %v733 = vmax.f32 %v701, 0.0
      %v734 = vmax.f32 %v702, 0.0
      %v735 = vmax.f32 %v703, 0.0
      %v736 = vmax.f32 %v704, 0.0
      %v737 = vmax.f32 %v705, 0.0
      %v738 = vmax.f32 %v706, 0.0
      %v739 = vmax.f32 %v707, 0.0
      %v740 = vmax.f32 %v708, 0.0
      %v741 = vmax.f32 %v709, 0.0
      %v742 = vmax.f32 %v710, 0.0
      %v743 = vmax.f32 %v711, 0.0
      %v744 = vmax.f32 %v712, 0.0
      %v745 = vmax.f32 %v713, 0.0
      %v746 = vmax.f32 %v714, 0.0
      %v747 = vmax.f32 %v715, 0.0
      %v748 = vmax.f32 %v716, 0.0
      %v749 = vmax.f32 %v717, 0.0
      %v750 = vmax.f32 %v718, 0.0
      %v751 = vmax.f32 %v719, 0.0
      %v752 = vmax.f32 %v720, 0.0
      %v753 = vmax.f32 %v721, 0.0
      %v754 = vmax.f32 %v722, 0.0
      %v755 = vmax.f32 %v723, 0.0
      %v756 = vmax.f32 %v724, 0.0
      %v757 = vpack.c.bf16 %v726, %v725
      %v758 = vpack.c.bf16 %v728, %v727
      %v759 = vpack.c.bf16 %v730, %v729
      %v760 = vpack.c.bf16 %v732, %v731
      %v761 = vpack.c.bf16 %v734, %v733
      %v762 = vpack.c.bf16 %v736, %v735
      %v763 = vpack.c.bf16 %v738, %v737
      %v764 = vpack.c.bf16 %v740, %v739
      %v765 = vpack.c.bf16 %v742, %v741
      %v766 = vpack.c.bf16 %v744, %v743
      %v767 = vpack.c.bf16 %v746, %v745
      %v768 = vpack.c.bf16 %v748, %v747
      %v769 = vpack.c.bf16 %v750, %v749
      %v770 = vpack.c.bf16 %v752, %v751
      %v771 = vpack.c.bf16 %v754, %v753
      %v772 = vpack.c.bf16 %v756, %v755
      %v789 = vunpack.c.l.b16 %v757
      %v790 = vunpack.c.h.b16 %v757
      %v791 = vunpack.c.l.b16 %v758
      %v792 = vunpack.c.h.b16 %v758
      %v793 = vunpack.c.l.b16 %v759
      %v794 = vunpack.c.h.b16 %v759
      %v795 = vunpack.c.l.b16 %v760
      %v796 = vunpack.c.h.b16 %v760
      %v797 = vunpack.c.l.b16 %v761
      %v798 = vunpack.c.h.b16 %v761
      %v799 = vunpack.c.l.b16 %v762
      %v800 = vunpack.c.h.b16 %v762
      %v801 = vunpack.c.l.b16 %v763
      %v802 = vunpack.c.h.b16 %v763
      %v803 = vunpack.c.l.b16 %v764
      %v804 = vunpack.c.h.b16 %v764
      %v805 = vunpack.c.l.b16 %v765
      %v806 = vunpack.c.h.b16 %v765
      %v807 = vunpack.c.l.b16 %v766
      %v808 = vunpack.c.h.b16 %v766
      %v809 = vunpack.c.l.b16 %v767
      %v810 = vunpack.c.h.b16 %v767
      %v811 = vunpack.c.l.b16 %v768
      %v812 = vunpack.c.h.b16 %v768
      %v813 = vunpack.c.l.b16 %v769
      %v814 = vunpack.c.h.b16 %v769
      %v815 = vunpack.c.l.b16 %v770
      %v816 = vunpack.c.h.b16 %v770
      %v817 = vunpack.c.l.b16 %v771
      %v818 = vunpack.c.h.b16 %v771
      %v819 = vunpack.c.l.b16 %v772
      %v820 = vunpack.c.h.b16 %v772
      %v821 = vpack.c.b16 %v789, %v789
      %v822 = vpack.c.b16 %v790, %v790
      %v823 = vpack.c.b16 %v791, %v791
      %v824 = vpack.c.b16 %v792, %v792
      %v825 = vpack.c.b16 %v793, %v793
      %v826 = vpack.c.b16 %v794, %v794
      %v827 = vpack.c.b16 %v795, %v795
      %v828 = vpack.c.b16 %v796, %v796
      %v829 = vpack.c.b16 %v797, %v797
      %v830 = vpack.c.b16 %v798, %v798
      %v831 = vpack.c.b16 %v799, %v799
      %v832 = vpack.c.b16 %v800, %v800
      %v833 = vpack.c.b16 %v801, %v801
      %v834 = vpack.c.b16 %v802, %v802
      %v835 = vpack.c.b16 %v803, %v803
      %v836 = vpack.c.b16 %v804, %v804
      %v837 = vpack.c.b16 %v805, %v805
      %v838 = vpack.c.b16 %v806, %v806
      %v839 = vpack.c.b16 %v807, %v807
      %v840 = vpack.c.b16 %v808, %v808
      %v841 = vpack.c.b16 %v809, %v809
      %v842 = vpack.c.b16 %v810, %v810
      %v843 = vpack.c.b16 %v811, %v811
      %v844 = vpack.c.b16 %v812, %v812
      %v845 = vpack.c.b16 %v813, %v813
      %v846 = vpack.c.b16 %v814, %v814
      %v847 = vpack.c.b16 %v815, %v815
      %v848 = vpack.c.b16 %v816, %v816
      %v849 = vpack.c.b16 %v817, %v817
      %v850 = vpack.c.b16 %v818, %v818
      %v851 = vpack.c.b16 %v819, %v819
      %v852 = vpack.c.b16 %v820, %v820
      %vm885 = vcmask 519168
      %886 = vst.msk [vmem:[%s274] sm:$0xf] %vm885, %v821
      %887 = vst.msk [vmem:[%s274 + $0x4] sm:$0xf] %vm885, %v822
      %888 = vst.msk [vmem:[%s274 + $0x8] sm:$0xf] %vm885, %v823
      %889 = vst.msk [vmem:[%s274 + $0xc] sm:$0xf] %vm885, %v824
      %890 = vst.msk [vmem:[%s274 + $0x10] sm:$0xf] %vm885, %v825
      %891 = vst.msk [vmem:[%s274 + $0x14] sm:$0xf] %vm885, %v826
      %892 = vst.msk [vmem:[%s274 + $0x18] sm:$0xf] %vm885, %v827
      %893 = vst.msk [vmem:[%s274 + $0x1c] sm:$0xf] %vm885, %v828
      %894 = vst.msk [vmem:[%s274 + $0x20] sm:$0xf] %vm885, %v829
      %895 = vst.msk [vmem:[%s274 + $0x24] sm:$0xf] %vm885, %v830
      %896 = vst.msk [vmem:[%s274 + $0x28] sm:$0xf] %vm885, %v831
      %897 = vst.msk [vmem:[%s274 + $0x2c] sm:$0xf] %vm885, %v832
      %898 = vst.msk [vmem:[%s274 + $0x30] sm:$0xf] %vm885, %v833
      %899 = vst.msk [vmem:[%s274 + $0x34] sm:$0xf] %vm885, %v834
      %900 = vst.msk [vmem:[%s274 + $0x38] sm:$0xf] %vm885, %v835
      %901 = vst.msk [vmem:[%s274 + $0x3c] sm:$0xf] %vm885, %v836
      %902 = vst.msk [vmem:[%s274 + $0x40] sm:$0xf] %vm885, %v837
      %903 = vst.msk [vmem:[%s274 + $0x44] sm:$0xf] %vm885, %v838
      %904 = vst.msk [vmem:[%s274 + $0x48] sm:$0xf] %vm885, %v839
      %905 = vst.msk [vmem:[%s274 + $0x4c] sm:$0xf] %vm885, %v840
      %906 = vst.msk [vmem:[%s274 + $0x50] sm:$0xf] %vm885, %v841
      %907 = vst.msk [vmem:[%s274 + $0x54] sm:$0xf] %vm885, %v842
      %908 = vst.msk [vmem:[%s274 + $0x58] sm:$0xf] %vm885, %v843
      %909 = vst.msk [vmem:[%s274 + $0x5c] sm:$0xf] %vm885, %v844
      %910 = vst.msk [vmem:[%s274 + $0x60] sm:$0xf] %vm885, %v845
      %911 = vst.msk [vmem:[%s274 + $0x64] sm:$0xf] %vm885, %v846
      %912 = vst.msk [vmem:[%s274 + $0x68] sm:$0xf] %vm885, %v847
      %913 = vst.msk [vmem:[%s274 + $0x6c] sm:$0xf] %vm885, %v848
      %914 = vst.msk [vmem:[%s274 + $0x70] sm:$0xf] %vm885, %v849
      %915 = vst.msk [vmem:[%s274 + $0x74] sm:$0xf] %vm885, %v850
      %916 = vst.msk [vmem:[%s274 + $0x78] sm:$0xf] %vm885, %v851
      %917 = vst.msk [vmem:[%s274 + $0x7c] sm:$0xf] %vm885, %v852
      %s918 = smul.u32 32, %s21
      %p919 = scmp.lt.s32.totalorder %s19, 1
      %s920 = scalar_select %p919, %s19, 1
      %p921 = scmp.lt.s32.totalorder %s918, 31
      %s922 = scalar_select %p921, %s918, 31
      %p923 = scmp.lt.s32.totalorder %s20, 0
      %s924 = scalar_select %p923, %s20, 0
      %s925 = sadd.s32 %s924, %s922
      %s926 = smul.addr %s920, 32
      %s927 = sadd.s32 %s925, %s926
      %s928 = smul.addr %s927, 4
      %s929 = scalar_lea.vmem %s3, %s928
      // Predicated region
      $region33: #{tpu_custom_call.1} parent=31 // pred_check
        %p930 = pneg %p135
      $region34: #{tpu_custom_call.1} parent=31 // pred_check_branch
        %932 = sbr.rel (%p930) target = $region36
      $region35: #{tpu_custom_call.1} parent=31 // pred_region
        %s933 = smul.u32 32, %s21
      $region36: #{tpu_custom_call.1} parent=31 // pred_fallthru
        _
    $region32: #{tpu_custom_call.1} parent=5 // pred_fallthru
      _
    %p934 = scmp.le.s32.totalorder 2, %s9
    // Predicated region
    $region37: #{tpu_custom_call.1} parent=5 // pred_check
      %p935 = pneg %p934
    $region38: #{tpu_custom_call.1} parent=5 // pred_check_branch
      %937 = sbr.rel (%p935) target = $region40
    $region39: #{tpu_custom_call.1} parent=5 // pred_region
      %s938 = ssub.s32 %s9, 2
      // Predicated region
      $region41: #{tpu_custom_call.1} parent=39 // pred_check
        %p939 = pneg %p141
      $region42: #{tpu_custom_call.1} parent=39 // pred_check_branch
        %941 = sbr.rel (%p939) target = $region44
      $region43: #{tpu_custom_call.1} parent=39 // pred_region
        %s942 = smul.u32 32, %s24
        %p943 = scmp.lt.s32.totalorder %s22, 1
        %s944 = scalar_select %p943, %s22, 1
        %p945 = scmp.lt.s32.totalorder %s942, 31
        %s946 = scalar_select %p945, %s942, 31
        %p947 = scmp.lt.s32.totalorder %s23, 0
        %s948 = scalar_select %p947, %s23, 0
        %s949 = sadd.s32 %s948, %s946
        %s950 = smul.addr %s944, 32
        %s951 = sadd.s32 %s949, %s950
        %s952 = smul.addr %s951, 4
        %s953 = scalar_lea.vmem %s3, %s952
      $region44: #{tpu_custom_call.1} parent=39 // pred_fallthru
        _
    $region40: #{tpu_custom_call.1} parent=5 // pred_fallthru
      _
  $region6: #{tpu_custom_call.1} parent=0 // loop_footer
    %s13 = sadd.s32 1, %s9
  $region7: #{tpu_custom_call.1} parent=0 // loop_footer_branch
    %8 = sbr.rel target = $region3
  $region8: #{tpu_custom_call.1} parent=0 // loop_exit
    _

</llo_original>
